<compile_context>
chip_gen: v5e
topology: v5e:2x2
jax: 0.10.0
libtpu: 0.0.40
codegen_flags: <defaults>
</compile_context>

<pallas_src>
import jax
import jax.numpy as jnp
from jax.experimental import pallas as pl
from jax.experimental.pallas import tpu as pltpu


def multi_fc_kernel(x_ref, w_ref, b_ref, o_ref):
    # x_ref: (BM, HW, C). avg_pool2d(4) on a 4x4 map == mean over HW, followed
    # by view(B, -1) -> (BM, C).  The 1/HW factor is pre-folded into w_ref by
    # the wrapper, so here we only need the sum (XLU sublane reduce).
    pooled = jnp.sum(x_ref[...].astype(jnp.float32), axis=1)          # (BM, C) f32

    # Single fused matmul for both heads (+ zero padding to a lane-dense width):
    # (BM, C) @ (C, Npad) on the MXU, f32 accumulation.
    acc = jnp.dot(pooled.astype(w_ref.dtype), w_ref[...],
                  preferred_element_type=jnp.float32)                 # (BM, Npad) f32
    o_ref[...] = (acc + b_ref[...].astype(jnp.float32)).astype(o_ref.dtype)


def _round_up(n, m):
    return (n + m - 1) // m * m


def multi_fc_forward(x_bhwc, w_main, b_main, w_2, b_2, *, block_b=128):
    """Preferred entry point: x_bhwc is the channels-last feature map
    (B, H*W, C) with H = W = 4 upstream.  Weights use PyTorch convention:
    w_*: (num_classes, C), b_*: (num_classes,)."""
    B, HW, C = x_bhwc.shape
    N = w_main.shape[0]
    n_cat = 2 * N
    # Pad the fused head width up to a multiple of 128 lanes -> unmasked stores.
    n_pad = max(128, _round_up(n_cat, 128))

    # Fuse the two heads into one (C, n_pad) weight / (1, n_pad) bias, folding
    # the avg-pool 1/HW scale into the weight (one-time wrapper-side glue).
    inv_hw = 1.0 / HW
    w_cat = jnp.concatenate([w_main, w_2], axis=0).T * inv_hw          # (C, 2N)
    w_cat = jnp.pad(w_cat, ((0, 0), (0, n_pad - n_cat)))               # (C, n_pad)
    b_cat = jnp.concatenate([b_main, b_2], axis=0).astype(jnp.float32)
    b_cat = jnp.pad(b_cat, (0, n_pad - n_cat)).reshape(1, n_pad)       # (1, n_pad)

    # Batch tile: multiple of 8 rows (sublane), capped by (padded) B.
    # 128 rows * 16 * 512 * 4B = 4 MiB per activation buffer -> fits v5e's
    # 16 MiB scoped VMEM with double buffering; weights/bias are resident.
    bm = min(_round_up(block_b, 8), _round_up(B, 8))
    grid = (pl.cdiv(B, bm),)

    out = pl.pallas_call(
        multi_fc_kernel,
        out_shape=jax.ShapeDtypeStruct((B, n_pad), jnp.float32),
        grid_spec=pltpu.PrefetchScalarGridSpec(
            num_scalar_prefetch=0,
            grid=grid,
            in_specs=[
                pl.BlockSpec((bm, HW, C), lambda i: (i, 0, 0)),  # streamed batch tile
                pl.BlockSpec((C, n_pad), lambda i: (0, 0)),      # resident fused weight
                pl.BlockSpec((1, n_pad), lambda i: (0, 0)),      # resident fused bias
            ],
            out_specs=pl.BlockSpec((bm, n_pad), lambda i: (i, 0)),
        ),
        compiler_params=pltpu.CompilerParams(
            dimension_semantics=("parallel",),
        ),
    )(x_bhwc, w_cat, b_cat)

    return out[:, :N], out[:, N:n_cat]


def multi_fc_forward_nchw(x_nchw, w_main, b_main, w_2, b_2, **kw):
    """Adapter for PyTorch-layout NCHW feature maps.
    TODO(synk): in production have the backbone emit NHWC / (B, HW, C) directly
    (or fold this transpose into its final XLA fusion) -- this transpose is a
    full HBM read+write of the feature map and dominates the head's cost."""
    B, C, H, W = x_nchw.shape
    assert H == 4 and W == 4, "head expects a 4x4 feature map (avg_pool2d(4) -> 1x1)"
    x_bhwc = jnp.transpose(x_nchw, (0, 2, 3, 1)).reshape(B, H * W, C)
    return multi_fc_forward(x_bhwc, w_main, b_main, w_2, b_2, **kw)


def reference_forward(x_nchw, w_main, b_main, w_2, b_2):
    # Pure-JAX reference of the PyTorch forward (post-backbone).
    B, C, H, W = x_nchw.shape
    pooled = jnp.mean(x_nchw.reshape(B, C, H * W), axis=-1)   # avg_pool2d(4) on 4x4
    flat = pooled.reshape(B, -1)
    om = flat @ w_main.T + b_main
    o2 = flat @ w_2.T + b_2
    return om, o2


if __name__ == "__main__":
    key = jax.random.PRNGKey(0)
    B = 2
    block_expansion = 1
    C = 512 * block_expansion      # dictated by nn.Linear(512 * block_expansion, ...)
    H = W = 4
    num_classes = 10

    k_x, k_wm, k_bm, k_w2, k_b2 = jax.random.split(key, 5)
    x = jax.random.normal(k_x, (B, C, H, W), dtype=jnp.float32)
    # deterministic "nn.Linear"-style params
    bound = 1.0 / jnp.sqrt(C)
    w_main = jax.random.uniform(k_wm, (num_classes, C), jnp.float32, -bound, bound)
    b_main = jax.random.uniform(k_bm, (num_classes,), jnp.float32, -bound, bound)
    w_2 = jax.random.uniform(k_w2, (num_classes, C), jnp.float32, -bound, bound)
    b_2 = jax.random.uniform(k_b2, (num_classes,), jnp.float32, -bound, bound)

    out_main, out_2 = multi_fc_forward_nchw(x, w_main, b_main, w_2, b_2)
    jax.block_until_ready((out_main, out_2))

    ref_main, ref_2 = reference_forward(x, w_main, b_main, w_2, b_2)
    assert out_main.shape == ref_main.shape and out_2.shape == ref_2.shape
    assert jnp.allclose(out_main, ref_main, atol=1e-4, rtol=1e-4)
    assert jnp.allclose(out_2, ref_2, atol=1e-4, rtol=1e-4)

    print("KERNEL_OK")
</pallas_src>

<mosaic_0001>
module attributes {stable_mosaic.version = 11 : i64} {
  func.func @multi_fc_kernel(%arg0: i32, %arg1: memref<8x16x512xf32, #tpu.memory_space<vmem>>, %arg2: memref<512x128xf32, #tpu.memory_space<vmem>>, %arg3: memref<1x128xf32, #tpu.memory_space<vmem>>, %arg4: memref<8x128xf32, #tpu.memory_space<vmem>>) attributes {dimension_semantics = [#tpu.dimension_semantics<parallel>], iteration_bounds = array<i64: 1>, scalar_prefetch = 0 : i64, scratch_operands = 0 : i64, tpu.core_type = #tpu.core_type<tc>, window_params = [{transform_indices = @transform_0, window_bounds = array<i64: 8, 16, 512>}, {pipeline_mode = #tpu.pipeline_mode<synchronous>, transform_indices = @transform_1, window_bounds = array<i64: 512, 128>}, {pipeline_mode = #tpu.pipeline_mode<synchronous>, transform_indices = @transform_2, window_bounds = array<i64: 1, 128>}, {transform_indices = @transform_3, window_bounds = array<i64: 8, 128>}]} {
    %c0 = arith.constant 0 : index
    %c0_0 = arith.constant 0 : index
    %c0_1 = arith.constant 0 : index
    %0 = vector.load %arg1[%c0, %c0_0, %c0_1] : memref<8x16x512xf32, #tpu.memory_space<vmem>>, vector<8x16x512xf32>
    %cst = arith.constant dense<0.000000e+00> : vector<8x512xf32>
    %1 = vector.multi_reduction <add>, %0, %cst [1] : vector<8x16x512xf32> to vector<8x512xf32>
    %c0_2 = arith.constant 0 : index
    %c0_3 = arith.constant 0 : index
    %2 = vector.load %arg2[%c0_2, %c0_3] : memref<512x128xf32, #tpu.memory_space<vmem>>, vector<512x128xf32>
    %cst_4 = arith.constant dense<0.000000e+00> : vector<8x128xf32>
    %3 = tpu.matmul %1, %2, %cst_4 {dimension_numbers = #tpu.dot_dimension_numbers<[1], [0], [0], [1], [0, 0, 1, 1], [], []>} : vector<8x512xf32>, vector<512x128xf32>, vector<8x128xf32> -> vector<8x128xf32>
    %c0_5 = arith.constant 0 : index
    %c0_6 = arith.constant 0 : index
    %4 = vector.load %arg3[%c0_5, %c0_6] : memref<1x128xf32, #tpu.memory_space<vmem>>, vector<1x128xf32>
    %5 = vector.broadcast %4 : vector<1x128xf32> to vector<8x128xf32>
    %6 = arith.addf %3, %5 : vector<8x128xf32>
    %c0_7 = arith.constant 0 : index
    %c0_8 = arith.constant 0 : index
    %7 = vector.load %arg4[%c0_7, %c0_8] : memref<8x128xf32, #tpu.memory_space<vmem>>, vector<8x128xf32>
    tpu.vector_store %arg4[%c0_7, %c0_8], %6 {strides = array<i32>} : memref<8x128xf32, #tpu.memory_space<vmem>>, vector<8x128xf32>,
    return
  }
  func.func @transform_0(%arg0: i32) -> (i32, i32, i32) {
    %c0_i32 = arith.constant 0 : i32
    %c0_i32_0 = arith.constant 0 : i32
    %c0_i32_1 = arith.constant 0 : i32
    return %arg0, %c0_i32, %c0_i32_0 : i32, i32, i32
  }
  func.func @transform_1(%arg0: i32) -> (i32, i32) {
    %c0_i32 = arith.constant 0 : i32
    %c0_i32_0 = arith.constant 0 : i32
    %c0_i32_1 = arith.constant 0 : i32
    return %c0_i32, %c0_i32_0 : i32, i32
  }
  func.func @transform_2(%arg0: i32) -> (i32, i32) {
    %c0_i32 = arith.constant 0 : i32
    %c0_i32_0 = arith.constant 0 : i32
    %c0_i32_1 = arith.constant 0 : i32
    return %c0_i32, %c0_i32_0 : i32, i32
  }
  func.func @transform_3(%arg0: i32) -> (i32, i32) {
    %c0_i32 = arith.constant 0 : i32
    %c0_i32_0 = arith.constant 0 : i32
    return %arg0, %c0_i32 : i32, i32
  }
}

</mosaic_0001>

<llo_original>
// kernel: tpu_custom_call.1
$region0: #{tpu_custom_call.1}
  #allocation0 [shape = 'u32[]', space=smem, size = 0x4, offset = 0x4, fixed_abs, tag = 'smem constant byte address 0x4 - core index']
  #allocation1 [shape = 'u32[72,128]{1,0:T(1,128)}', space=vmem, size = 0x9000, scoped, tag = 'internal scratch']
  %s0 = inlined_call_operand.hbm [shape: f32[2,16,512], index: 0, kind: input, shape index: {}]
  %s1 = inlined_call_operand.hbm [shape: f32[512,128], index: 1, kind: input, shape index: {}]
  %s2 = inlined_call_operand.vmem [shape: f32[1,128], index: 2, kind: input, shape index: {}]
  %s3 = inlined_call_operand.hbm [shape: f32[2,128], index: 3, kind: output, shape index: {}]
  %s4 = sld [smem:[#allocation0]]
  $region30: #{tpu_custom_call.1} parent=0
    _
  %s6 = ssub.s32 1, %s4
  %s7 = scalar_select 0, %s6, %s4
  $region1: #{tpu_custom_call.1} parent=0
    #allocation2 [shape = 'u8[262144]{0}', space=vmem, size = 0x40000, scoped, tag = 'input window, operand 0, single buffered']
    #allocation3 [shape = 's32[1]{0}', space=sflag, size = 0x4, scoped, tag = 'scoped memory for tpu_custom_call.1']
    #allocation4 [shape = 's32[1]{0}', space=sflag, size = 0x4, scoped, tag = 'scoped memory for tpu_custom_call.1']
    #allocation5 [shape = 'u8[262144]{0}', space=vmem, size = 0x40000, scoped, tag = 'input window, operand 1, single buffered']
    #allocation6 [shape = 's32[1]{0}', space=sflag, size = 0x4, scoped, tag = 'scoped memory for tpu_custom_call.1']
    #allocation7 [shape = 'u8[4096]{0}', space=vmem, size = 0x1000, scoped, tag = 'output window, operand 0, single buffered']
    %8 = vsyncpa [#allocation3], 0
    %9 = vsyncpa [#allocation6], 0
    %10 = vsyncpa [#allocation4], 0
    // Predicated region
    $region2: #{tpu_custom_call.1} parent=1 // pred_check
      _
    $region3: #{tpu_custom_call.1} parent=1 // pred_check_branch
      %12 = sbr.rel (0) target = $region5
    $region4: #{tpu_custom_call.1} parent=1 // pred_region
      %14 = vsyncadd [#allocation3], 6144
      %s15 = sshll.u32 %s0, 4
      %s16 = int_to_ptr.hbm [resolvable:$true] %s15
      %s17 = sshll.u32 [#allocation2], 4
      %s18 = int_to_ptr.vmem [resolvable:$true] %s17
      %23 = dma.hbm_to_vmem [thread:$0]  %s16, 2048, %s18, [#allocation3], 512, 512, 32
    $region5: #{tpu_custom_call.1} parent=1 // pred_fallthru
      _
    // Predicated region
    $region6: #{tpu_custom_call.1} parent=1 // pred_check
      _
    $region7: #{tpu_custom_call.1} parent=1 // pred_check_branch
      %25 = sbr.rel (0) target = $region9
    $region8: #{tpu_custom_call.1} parent=1 // pred_region
      %27 = vsyncadd [#allocation6], 0
      %s28 = sshll.u32 %s1, 4
      %s29 = int_to_ptr.hbm [resolvable:$true] %s28
      %s30 = sshll.u32 [#allocation5], 4
      %s31 = int_to_ptr.vmem [resolvable:$true] %s30
      %36 = dma.hbm_to_vmem [thread:$0]  %s29, 8192, %s31, [#allocation6], 128, 128, 8
    $region9: #{tpu_custom_call.1} parent=1 // pred_fallthru
      _
    // Predicated region
    $region10: #{tpu_custom_call.1} parent=1 // pred_check
      _
    $region11: #{tpu_custom_call.1} parent=1 // pred_check_branch
      %38 = sbr.rel (0) target = $region13
    $region12: #{tpu_custom_call.1} parent=1 // pred_region
      _
    $region13: #{tpu_custom_call.1} parent=1 // pred_fallthru
      _
    // Predicated region
    $region14: #{tpu_custom_call.1} parent=1 // pred_check
      _
    $region15: #{tpu_custom_call.1} parent=1 // pred_check_branch
      %40 = sbr.rel (0) target = $region17
    $region16: #{tpu_custom_call.1} parent=1 // pred_region
      %42 = dma.done [#allocation3], 8192
    $region17: #{tpu_custom_call.1} parent=1 // pred_fallthru
      _
    // Predicated region
    $region18: #{tpu_custom_call.1} parent=1 // pred_check
      _
    $region19: #{tpu_custom_call.1} parent=1 // pred_check_branch
      %44 = sbr.rel (0) target = $region21
    $region20: #{tpu_custom_call.1} parent=1 // pred_region
      %46 = dma.done [#allocation6], 8192
    $region21: #{tpu_custom_call.1} parent=1 // pred_fallthru
      _
    %v47 = vld [vmem:[#allocation2] sm:$0xff]
    %v48 = vld [vmem:[#allocation2 + $0x8] sm:$0xff]
    %v49 = vld [vmem:[#allocation2 + $0x10] sm:$0xff]
    %v50 = vld [vmem:[#allocation2 + $0x18] sm:$0xff]
    %v51 = vld [vmem:[#allocation2 + $0x20] sm:$0xff]
    %v52 = vld [vmem:[#allocation2 + $0x28] sm:$0xff]
    %v53 = vld [vmem:[#allocation2 + $0x30] sm:$0xff]
    %v54 = vld [vmem:[#allocation2 + $0x38] sm:$0xff]
    %v55 = vld [vmem:[#allocation2 + $0x40] sm:$0xff]
    %v56 = vld [vmem:[#allocation2 + $0x48] sm:$0xff]
    %v57 = vld [vmem:[#allocation2 + $0x50] sm:$0xff]
    %v58 = vld [vmem:[#allocation2 + $0x58] sm:$0xff]
    %v59 = vld [vmem:[#allocation2 + $0x60] sm:$0xff]
    %v60 = vld [vmem:[#allocation2 + $0x68] sm:$0xff]
    %v61 = vld [vmem:[#allocation2 + $0x70] sm:$0xff]
    %v62 = vld [vmem:[#allocation2 + $0x78] sm:$0xff]
    %v63 = vld [vmem:[#allocation2 + $0x80] sm:$0xff]
    %v64 = vld [vmem:[#allocation2 + $0x88] sm:$0xff]
    %v65 = vld [vmem:[#allocation2 + $0x90] sm:$0xff]
    %v66 = vld [vmem:[#allocation2 + $0x98] sm:$0xff]
    %v67 = vld [vmem:[#allocation2 + $0xa0] sm:$0xff]
    %v68 = vld [vmem:[#allocation2 + $0xa8] sm:$0xff]
    %v69 = vld [vmem:[#allocation2 + $0xb0] sm:$0xff]
    %v70 = vld [vmem:[#allocation2 + $0xb8] sm:$0xff]
    %v71 = vld [vmem:[#allocation2 + $0xc0] sm:$0xff]
    %v72 = vld [vmem:[#allocation2 + $0xc8] sm:$0xff]
    %v73 = vld [vmem:[#allocation2 + $0xd0] sm:$0xff]
    %v74 = vld [vmem:[#allocation2 + $0xd8] sm:$0xff]
    %v75 = vld [vmem:[#allocation2 + $0xe0] sm:$0xff]
    %v76 = vld [vmem:[#allocation2 + $0xe8] sm:$0xff]
    %v77 = vld [vmem:[#allocation2 + $0xf0] sm:$0xff]
    %v78 = vld [vmem:[#allocation2 + $0xf8] sm:$0xff]
    %v79 = vld [vmem:[#allocation2 + $0x100] sm:$0xff]
    %v80 = vld [vmem:[#allocation2 + $0x108] sm:$0xff]
    %v81 = vld [vmem:[#allocation2 + $0x110] sm:$0xff]
    %v82 = vld [vmem:[#allocation2 + $0x118] sm:$0xff]
    %v83 = vld [vmem:[#allocation2 + $0x120] sm:$0xff]
    %v84 = vld [vmem:[#allocation2 + $0x128] sm:$0xff]
    %v85 = vld [vmem:[#allocation2 + $0x130] sm:$0xff]
    %v86 = vld [vmem:[#allocation2 + $0x138] sm:$0xff]
    %v87 = vld [vmem:[#allocation2 + $0x140] sm:$0xff]
    %v88 = vld [vmem:[#allocation2 + $0x148] sm:$0xff]
    %v89 = vld [vmem:[#allocation2 + $0x150] sm:$0xff]
    %v90 = vld [vmem:[#allocation2 + $0x158] sm:$0xff]
    %v91 = vld [vmem:[#allocation2 + $0x160] sm:$0xff]
    %v92 = vld [vmem:[#allocation2 + $0x168] sm:$0xff]
    %v93 = vld [vmem:[#allocation2 + $0x170] sm:$0xff]
    %v94 = vld [vmem:[#allocation2 + $0x178] sm:$0xff]
    %v95 = vld [vmem:[#allocation2 + $0x180] sm:$0xff]
    %v96 = vld [vmem:[#allocation2 + $0x188] sm:$0xff]
    %v97 = vld [vmem:[#allocation2 + $0x190] sm:$0xff]
    %v98 = vld [vmem:[#allocation2 + $0x198] sm:$0xff]
    %v99 = vld [vmem:[#allocation2 + $0x1a0] sm:$0xff]
    %v100 = vld [vmem:[#allocation2 + $0x1a8] sm:$0xff]
    %v101 = vld [vmem:[#allocation2 + $0x1b0] sm:$0xff]
    %v102 = vld [vmem:[#allocation2 + $0x1b8] sm:$0xff]
    %v103 = vld [vmem:[#allocation2 + $0x1c0] sm:$0xff]
    %v104 = vld [vmem:[#allocation2 + $0x1c8] sm:$0xff]
    %v105 = vld [vmem:[#allocation2 + $0x1d0] sm:$0xff]
    %v106 = vld [vmem:[#allocation2 + $0x1d8] sm:$0xff]
    %v107 = vld [vmem:[#allocation2 + $0x1e0] sm:$0xff]
    %v108 = vld [vmem:[#allocation2 + $0x1e8] sm:$0xff]
    %v109 = vld [vmem:[#allocation2 + $0x1f0] sm:$0xff]
    %v110 = vld [vmem:[#allocation2 + $0x1f8] sm:$0xff]
    %v111 = vadd.f32 %v47, %v51
    %v112 = vrot.slane %v111, 4
    %v113 = vadd.f32 %v111, %v112
    %v114 = vrot.slane %v113, 2
    %v115 = vadd.f32 %v113, %v114
    %v116 = vrot.slane %v115, 1
    %v117 = vadd.f32 %v115, %v116
    %v118 = vadd.f32 %v48, %v52
    %v119 = vrot.slane %v118, 4
    %v120 = vadd.f32 %v118, %v119
    %v121 = vrot.slane %v120, 2
    %v122 = vadd.f32 %v120, %v121
    %v123 = vrot.slane %v122, 1
    %v124 = vadd.f32 %v122, %v123
    %v125 = vadd.f32 %v49, %v53
    %v126 = vrot.slane %v125, 4
    %v127 = vadd.f32 %v125, %v126
    %v128 = vrot.slane %v127, 2
    %v129 = vadd.f32 %v127, %v128
    %v130 = vrot.slane %v129, 1
    %v131 = vadd.f32 %v129, %v130
    %v132 = vadd.f32 %v50, %v54
    %v133 = vrot.slane %v132, 4
    %v134 = vadd.f32 %v132, %v133
    %v135 = vrot.slane %v134, 2
    %v136 = vadd.f32 %v134, %v135
    %v137 = vrot.slane %v136, 1
    %v138 = vadd.f32 %v136, %v137
    %v139 = vadd.f32 %v55, %v59
    %v140 = vrot.slane %v139, 4
    %v141 = vadd.f32 %v139, %v140
    %v142 = vrot.slane %v141, 2
    %v143 = vadd.f32 %v141, %v142
    %v144 = vrot.slane %v143, 1
    %v145 = vadd.f32 %v143, %v144
    %v146 = vadd.f32 %v56, %v60
    %v147 = vrot.slane %v146, 4
    %v148 = vadd.f32 %v146, %v147
    %v149 = vrot.slane %v148, 2
    %v150 = vadd.f32 %v148, %v149
    %v151 = vrot.slane %v150, 1
    %v152 = vadd.f32 %v150, %v151
    %v153 = vadd.f32 %v57, %v61
    %v154 = vrot.slane %v153, 4
    %v155 = vadd.f32 %v153, %v154
    %v156 = vrot.slane %v155, 2
    %v157 = vadd.f32 %v155, %v156
    %v158 = vrot.slane %v157, 1
    %v159 = vadd.f32 %v157, %v158
    %v160 = vadd.f32 %v58, %v62
    %v161 = vrot.slane %v160, 4
    %v162 = vadd.f32 %v160, %v161
    %v163 = vrot.slane %v162, 2
    %v164 = vadd.f32 %v162, %v163
    %v165 = vrot.slane %v164, 1
    %v166 = vadd.f32 %v164, %v165
    %v167 = vadd.f32 %v63, %v67
    %v168 = vrot.slane %v167, 4
    %v169 = vadd.f32 %v167, %v168
    %v170 = vrot.slane %v169, 2
    %v171 = vadd.f32 %v169, %v170
    %v172 = vrot.slane %v171, 1
    %v173 = vadd.f32 %v171, %v172
    %v174 = vadd.f32 %v64, %v68
    %v175 = vrot.slane %v174, 4
    %v176 = vadd.f32 %v174, %v175
    %v177 = vrot.slane %v176, 2
    %v178 = vadd.f32 %v176, %v177
    %v179 = vrot.slane %v178, 1
    %v180 = vadd.f32 %v178, %v179
    %v181 = vadd.f32 %v65, %v69
    %v182 = vrot.slane %v181, 4
    %v183 = vadd.f32 %v181, %v182
    %v184 = vrot.slane %v183, 2
    %v185 = vadd.f32 %v183, %v184
    %v186 = vrot.slane %v185, 1
    %v187 = vadd.f32 %v185, %v186
    %v188 = vadd.f32 %v66, %v70
    %v189 = vrot.slane %v188, 4
    %v190 = vadd.f32 %v188, %v189
    %v191 = vrot.slane %v190, 2
    %v192 = vadd.f32 %v190, %v191
    %v193 = vrot.slane %v192, 1
    %v194 = vadd.f32 %v192, %v193
    %v195 = vadd.f32 %v71, %v75
    %v196 = vrot.slane %v195, 4
    %v197 = vadd.f32 %v195, %v196
    %v198 = vrot.slane %v197, 2
    %v199 = vadd.f32 %v197, %v198
    %v200 = vrot.slane %v199, 1
    %v201 = vadd.f32 %v199, %v200
    %v202 = vadd.f32 %v72, %v76
    %v203 = vrot.slane %v202, 4
    %v204 = vadd.f32 %v202, %v203
    %v205 = vrot.slane %v204, 2
    %v206 = vadd.f32 %v204, %v205
    %v207 = vrot.slane %v206, 1
    %v208 = vadd.f32 %v206, %v207
    %v209 = vadd.f32 %v73, %v77
    %v210 = vrot.slane %v209, 4
    %v211 = vadd.f32 %v209, %v210
    %v212 = vrot.slane %v211, 2
    %v213 = vadd.f32 %v211, %v212
    %v214 = vrot.slane %v213, 1
    %v215 = vadd.f32 %v213, %v214
    %v216 = vadd.f32 %v74, %v78
    %v217 = vrot.slane %v216, 4
    %v218 = vadd.f32 %v216, %v217
    %v219 = vrot.slane %v218, 2
    %v220 = vadd.f32 %v218, %v219
    %v221 = vrot.slane %v220, 1
    %v222 = vadd.f32 %v220, %v221
    %v223 = vadd.f32 %v79, %v83
    %v224 = vrot.slane %v223, 4
    %v225 = vadd.f32 %v223, %v224
    %v226 = vrot.slane %v225, 2
    %v227 = vadd.f32 %v225, %v226
    %v228 = vrot.slane %v227, 1
    %v229 = vadd.f32 %v227, %v228
    %v230 = vadd.f32 %v80, %v84
    %v231 = vrot.slane %v230, 4
    %v232 = vadd.f32 %v230, %v231
    %v233 = vrot.slane %v232, 2
    %v234 = vadd.f32 %v232, %v233
    %v235 = vrot.slane %v234, 1
    %v236 = vadd.f32 %v234, %v235
    %v237 = vadd.f32 %v81, %v85
    %v238 = vrot.slane %v237, 4
    %v239 = vadd.f32 %v237, %v238
    %v240 = vrot.slane %v239, 2
    %v241 = vadd.f32 %v239, %v240
    %v242 = vrot.slane %v241, 1
    %v243 = vadd.f32 %v241, %v242
    %v244 = vadd.f32 %v82, %v86
    %v245 = vrot.slane %v244, 4
    %v246 = vadd.f32 %v244, %v245
    %v247 = vrot.slane %v246, 2
    %v248 = vadd.f32 %v246, %v247
    %v249 = vrot.slane %v248, 1
    %v250 = vadd.f32 %v248, %v249
    %v251 = vadd.f32 %v87, %v91
    %v252 = vrot.slane %v251, 4
    %v253 = vadd.f32 %v251, %v252
    %v254 = vrot.slane %v253, 2
    %v255 = vadd.f32 %v253, %v254
    %v256 = vrot.slane %v255, 1
    %v257 = vadd.f32 %v255, %v256
    %v258 = vadd.f32 %v88, %v92
    %v259 = vrot.slane %v258, 4
    %v260 = vadd.f32 %v258, %v259
    %v261 = vrot.slane %v260, 2
    %v262 = vadd.f32 %v260, %v261
    %v263 = vrot.slane %v262, 1
    %v264 = vadd.f32 %v262, %v263
    %v265 = vadd.f32 %v89, %v93
    %v266 = vrot.slane %v265, 4
    %v267 = vadd.f32 %v265, %v266
    %v268 = vrot.slane %v267, 2
    %v269 = vadd.f32 %v267, %v268
    %v270 = vrot.slane %v269, 1
    %v271 = vadd.f32 %v269, %v270
    %v272 = vadd.f32 %v90, %v94
    %v273 = vrot.slane %v272, 4
    %v274 = vadd.f32 %v272, %v273
    %v275 = vrot.slane %v274, 2
    %v276 = vadd.f32 %v274, %v275
    %v277 = vrot.slane %v276, 1
    %v278 = vadd.f32 %v276, %v277
    %v279 = vadd.f32 %v95, %v99
    %v280 = vrot.slane %v279, 4
    %v281 = vadd.f32 %v279, %v280
    %v282 = vrot.slane %v281, 2
    %v283 = vadd.f32 %v281, %v282
    %v284 = vrot.slane %v283, 1
    %v285 = vadd.f32 %v283, %v284
    %v286 = vadd.f32 %v96, %v100
    %v287 = vrot.slane %v286, 4
    %v288 = vadd.f32 %v286, %v287
    %v289 = vrot.slane %v288, 2
    %v290 = vadd.f32 %v288, %v289
    %v291 = vrot.slane %v290, 1
    %v292 = vadd.f32 %v290, %v291
    %v293 = vadd.f32 %v97, %v101
    %v294 = vrot.slane %v293, 4
    %v295 = vadd.f32 %v293, %v294
    %v296 = vrot.slane %v295, 2
    %v297 = vadd.f32 %v295, %v296
    %v298 = vrot.slane %v297, 1
    %v299 = vadd.f32 %v297, %v298
    %v300 = vadd.f32 %v98, %v102
    %v301 = vrot.slane %v300, 4
    %v302 = vadd.f32 %v300, %v301
    %v303 = vrot.slane %v302, 2
    %v304 = vadd.f32 %v302, %v303
    %v305 = vrot.slane %v304, 1
    %v306 = vadd.f32 %v304, %v305
    %v307 = vadd.f32 %v103, %v107
    %v308 = vrot.slane %v307, 4
    %v309 = vadd.f32 %v307, %v308
    %v310 = vrot.slane %v309, 2
    %v311 = vadd.f32 %v309, %v310
    %v312 = vrot.slane %v311, 1
    %v313 = vadd.f32 %v311, %v312
    %v314 = vadd.f32 %v104, %v108
    %v315 = vrot.slane %v314, 4
    %v316 = vadd.f32 %v314, %v315
    %v317 = vrot.slane %v316, 2
    %v318 = vadd.f32 %v316, %v317
    %v319 = vrot.slane %v318, 1
    %v320 = vadd.f32 %v318, %v319
    %v321 = vadd.f32 %v105, %v109
    %v322 = vrot.slane %v321, 4
    %v323 = vadd.f32 %v321, %v322
    %v324 = vrot.slane %v323, 2
    %v325 = vadd.f32 %v323, %v324
    %v326 = vrot.slane %v325, 1
    %v327 = vadd.f32 %v325, %v326
    %v328 = vadd.f32 %v106, %v110
    %v329 = vrot.slane %v328, 4
    %v330 = vadd.f32 %v328, %v329
    %v331 = vrot.slane %v330, 2
    %v332 = vadd.f32 %v330, %v331
    %v333 = vrot.slane %v332, 1
    %v334 = vadd.f32 %v332, %v333
    %v335 = vld [vmem:[#allocation5] sm:$0xff]
    %v336 = vld [vmem:[#allocation5 + $0x8] sm:$0xff]
    %v337 = vld [vmem:[#allocation5 + $0x10] sm:$0xff]
    %v338 = vld [vmem:[#allocation5 + $0x18] sm:$0xff]
    %v339 = vld [vmem:[#allocation5 + $0x20] sm:$0xff]
    %v340 = vld [vmem:[#allocation5 + $0x28] sm:$0xff]
    %v341 = vld [vmem:[#allocation5 + $0x30] sm:$0xff]
    %v342 = vld [vmem:[#allocation5 + $0x38] sm:$0xff]
    %v343 = vld [vmem:[#allocation5 + $0x40] sm:$0xff]
    %v344 = vld [vmem:[#allocation5 + $0x48] sm:$0xff]
    %v345 = vld [vmem:[#allocation5 + $0x50] sm:$0xff]
    %v346 = vld [vmem:[#allocation5 + $0x58] sm:$0xff]
    %v347 = vld [vmem:[#allocation5 + $0x60] sm:$0xff]
    %v348 = vld [vmem:[#allocation5 + $0x68] sm:$0xff]
    %v349 = vld [vmem:[#allocation5 + $0x70] sm:$0xff]
    %v350 = vld [vmem:[#allocation5 + $0x78] sm:$0xff]
    %v351 = vld [vmem:[#allocation5 + $0x80] sm:$0xff]
    %v352 = vld [vmem:[#allocation5 + $0x88] sm:$0xff]
    %v353 = vld [vmem:[#allocation5 + $0x90] sm:$0xff]
    %v354 = vld [vmem:[#allocation5 + $0x98] sm:$0xff]
    %v355 = vld [vmem:[#allocation5 + $0xa0] sm:$0xff]
    %v356 = vld [vmem:[#allocation5 + $0xa8] sm:$0xff]
    %v357 = vld [vmem:[#allocation5 + $0xb0] sm:$0xff]
    %v358 = vld [vmem:[#allocation5 + $0xb8] sm:$0xff]
    %v359 = vld [vmem:[#allocation5 + $0xc0] sm:$0xff]
    %v360 = vld [vmem:[#allocation5 + $0xc8] sm:$0xff]
    %v361 = vld [vmem:[#allocation5 + $0xd0] sm:$0xff]
    %v362 = vld [vmem:[#allocation5 + $0xd8] sm:$0xff]
    %v363 = vld [vmem:[#allocation5 + $0xe0] sm:$0xff]
    %v364 = vld [vmem:[#allocation5 + $0xe8] sm:$0xff]
    %v365 = vld [vmem:[#allocation5 + $0xf0] sm:$0xff]
    %v366 = vld [vmem:[#allocation5 + $0xf8] sm:$0xff]
    %v367 = vld [vmem:[#allocation5 + $0x100] sm:$0xff]
    %v368 = vld [vmem:[#allocation5 + $0x108] sm:$0xff]
    %v369 = vld [vmem:[#allocation5 + $0x110] sm:$0xff]
    %v370 = vld [vmem:[#allocation5 + $0x118] sm:$0xff]
    %v371 = vld [vmem:[#allocation5 + $0x120] sm:$0xff]
    %v372 = vld [vmem:[#allocation5 + $0x128] sm:$0xff]
    %v373 = vld [vmem:[#allocation5 + $0x130] sm:$0xff]
    %v374 = vld [vmem:[#allocation5 + $0x138] sm:$0xff]
    %v375 = vld [vmem:[#allocation5 + $0x140] sm:$0xff]
    %v376 = vld [vmem:[#allocation5 + $0x148] sm:$0xff]
    %v377 = vld [vmem:[#allocation5 + $0x150] sm:$0xff]
    %v378 = vld [vmem:[#allocation5 + $0x158] sm:$0xff]
    %v379 = vld [vmem:[#allocation5 + $0x160] sm:$0xff]
    %v380 = vld [vmem:[#allocation5 + $0x168] sm:$0xff]
    %v381 = vld [vmem:[#allocation5 + $0x170] sm:$0xff]
    %v382 = vld [vmem:[#allocation5 + $0x178] sm:$0xff]
    %v383 = vld [vmem:[#allocation5 + $0x180] sm:$0xff]
    %v384 = vld [vmem:[#allocation5 + $0x188] sm:$0xff]
    %v385 = vld [vmem:[#allocation5 + $0x190] sm:$0xff]
    %v386 = vld [vmem:[#allocation5 + $0x198] sm:$0xff]
    %v387 = vld [vmem:[#allocation5 + $0x1a0] sm:$0xff]
    %v388 = vld [vmem:[#allocation5 + $0x1a8] sm:$0xff]
    %v389 = vld [vmem:[#allocation5 + $0x1b0] sm:$0xff]
    %v390 = vld [vmem:[#allocation5 + $0x1b8] sm:$0xff]
    %v391 = vld [vmem:[#allocation5 + $0x1c0] sm:$0xff]
    %v392 = vld [vmem:[#allocation5 + $0x1c8] sm:$0xff]
    %v393 = vld [vmem:[#allocation5 + $0x1d0] sm:$0xff]
    %v394 = vld [vmem:[#allocation5 + $0x1d8] sm:$0xff]
    %v395 = vld [vmem:[#allocation5 + $0x1e0] sm:$0xff]
    %v396 = vld [vmem:[#allocation5 + $0x1e8] sm:$0xff]
    %v397 = vld [vmem:[#allocation5 + $0x1f0] sm:$0xff]
    %v398 = vld [vmem:[#allocation5 + $0x1f8] sm:$0xff]
    %v399 = vld [vmem:[%s2] sm:$0x1]
    %v401 = vperm.slane %v399, 0
    %vm435 = vcmask 1041409
    %v436 = vsel %vm435, %v145, %v117
    %vm437 = vcmask 1042434
    %v438 = vsel %vm437, %v173, %v436
    %vm439 = vcmask 1043459
    %v440 = vsel %vm439, %v201, %v438
    %vm441 = vcmask 1044484
    %v442 = vsel %vm441, %v229, %v440
    %vm443 = vcmask 1045509
    %v444 = vsel %vm443, %v257, %v442
    %vm445 = vcmask 1046534
    %v446 = vsel %vm445, %v285, %v444
    %vm447 = vcmask 1047559
    %v448 = vsel %vm447, %v313, %v446
    %v449 = vsel %vm435, %v152, %v124
    %v450 = vsel %vm437, %v180, %v449
    %v451 = vsel %vm439, %v208, %v450
    %v452 = vsel %vm441, %v236, %v451
    %v453 = vsel %vm443, %v264, %v452
    %v454 = vsel %vm445, %v292, %v453
    %v455 = vsel %vm447, %v320, %v454
    %v456 = vsel %vm435, %v159, %v131
    %v457 = vsel %vm437, %v187, %v456
    %v458 = vsel %vm439, %v215, %v457
    %v459 = vsel %vm441, %v243, %v458
    %v460 = vsel %vm443, %v271, %v459
    %v461 = vsel %vm445, %v299, %v460
    %v462 = vsel %vm447, %v327, %v461
    %v463 = vsel %vm435, %v166, %v138
    %v464 = vsel %vm437, %v194, %v463
    %v465 = vsel %vm439, %v222, %v464
    %v466 = vsel %vm441, %v250, %v465
    %v467 = vsel %vm443, %v278, %v466
    %v468 = vsel %vm445, %v306, %v467
    %v469 = vsel %vm447, %v334, %v468
    %474 = vmatpush.msra.mxu0 %v350
    %475 = vmatpush.msra.mxu0 %v349
    %476 = vmatpush.msra.mxu0 %v348
    %477 = vmatpush.msra.mxu0 %v347
    %478 = vmatpush.msra.mxu0 %v346
    %479 = vmatpush.msra.mxu0 %v345
    %480 = vmatpush.msra.mxu0 %v344
    %481 = vmatpush.msra.mxu0 %v343
    %482 = vmatpush.msra.mxu0 %v342
    %483 = vmatpush.msra.mxu0 %v341
    %484 = vmatpush.msra.mxu0 %v340
    %485 = vmatpush.msra.mxu0 %v339
    %486 = vmatpush.msra.mxu0 %v338
    %487 = vmatpush.msra.mxu0 %v337
    %488 = vmatpush.msra.mxu0 %v336
    %489 = vmatpush.msra.mxu0 %v335
    %490 = vmatmul.f32.gmra.mxu0 %v448
    %v491 = vpop.f32.mrf.mxu0
    %v492 = vadd.f32 %v401, %v491
    %493 = vdwg.mxu0
    %494 = vmatpush.msra.mxu0 %v366
    %495 = vmatpush.msra.mxu0 %v365
    %496 = vmatpush.msra.mxu0 %v364
    %497 = vmatpush.msra.mxu0 %v363
    %498 = vmatpush.msra.mxu0 %v362
    %499 = vmatpush.msra.mxu0 %v361
    %500 = vmatpush.msra.mxu0 %v360
    %501 = vmatpush.msra.mxu0 %v359
    %502 = vmatpush.msra.mxu0 %v358
    %503 = vmatpush.msra.mxu0 %v357
    %504 = vmatpush.msra.mxu0 %v356
    %505 = vmatpush.msra.mxu0 %v355
    %506 = vmatpush.msra.mxu0 %v354
    %507 = vmatpush.msra.mxu0 %v353
    %508 = vmatpush.msra.mxu0 %v352
    %509 = vmatpush.msra.mxu0 %v351
    %510 = vmatmul.f32.gmra.mxu0 %v455
    %v511 = vpop.f32.mrf.mxu0
    %v512 = vadd.f32 %v492, %v511
    %513 = vdwg.mxu0
    %514 = vmatpush.msra.mxu0 %v382
    %515 = vmatpush.msra.mxu0 %v381
    %516 = vmatpush.msra.mxu0 %v380
    %517 = vmatpush.msra.mxu0 %v379
    %518 = vmatpush.msra.mxu0 %v378
    %519 = vmatpush.msra.mxu0 %v377
    %520 = vmatpush.msra.mxu0 %v376
    %521 = vmatpush.msra.mxu0 %v375
    %522 = vmatpush.msra.mxu0 %v374
    %523 = vmatpush.msra.mxu0 %v373
    %524 = vmatpush.msra.mxu0 %v372
    %525 = vmatpush.msra.mxu0 %v371
    %526 = vmatpush.msra.mxu0 %v370
    %527 = vmatpush.msra.mxu0 %v369
    %528 = vmatpush.msra.mxu0 %v368
    %529 = vmatpush.msra.mxu0 %v367
    %530 = vmatmul.f32.gmra.mxu0 %v462
    %v531 = vpop.f32.mrf.mxu0
    %v532 = vadd.f32 %v512, %v531
    %533 = vdwg.mxu0
    %534 = vmatpush.msra.mxu0 %v398
    %535 = vmatpush.msra.mxu0 %v397
    %536 = vmatpush.msra.mxu0 %v396
    %537 = vmatpush.msra.mxu0 %v395
    %538 = vmatpush.msra.mxu0 %v394
    %539 = vmatpush.msra.mxu0 %v393
    %540 = vmatpush.msra.mxu0 %v392
    %541 = vmatpush.msra.mxu0 %v391
    %542 = vmatpush.msra.mxu0 %v390
    %543 = vmatpush.msra.mxu0 %v389
    %544 = vmatpush.msra.mxu0 %v388
    %545 = vmatpush.msra.mxu0 %v387
    %546 = vmatpush.msra.mxu0 %v386
    %547 = vmatpush.msra.mxu0 %v385
    %548 = vmatpush.msra.mxu0 %v384
    %549 = vmatpush.msra.mxu0 %v383
    %550 = vmatmul.f32.gmra.mxu0 %v469
    %v551 = vpop.f32.mrf.mxu0
    %v552 = vadd.f32 %v532, %v551
    %553 = vdwg.mxu0
    %554 = vst [vmem:[#allocation7] sm:$0xff] %v552
    // Predicated region
    $region22: #{tpu_custom_call.1} parent=1 // pred_check
      _
    $region23: #{tpu_custom_call.1} parent=1 // pred_check_branch
      %556 = sbr.rel (0) target = $region25
    $region24: #{tpu_custom_call.1} parent=1 // pred_region
      %558 = vsyncadd [#allocation4], 96
      %s559 = sshll.u32 [#allocation7], 4
      %s560 = int_to_ptr.vmem [resolvable:$true] %s559
      %s561 = sshll.u32 %s3, 4
      %s562 = int_to_ptr.hbm [resolvable:$true] %s561
      %567 = dma.vmem_to_hbm [thread:$0]  %s560, 32, %s562, [#allocation4], 32, 32, 2
    $region25: #{tpu_custom_call.1} parent=1 // pred_fallthru
      _
    // Predicated region
    $region26: #{tpu_custom_call.1} parent=1 // pred_check
      _
    $region27: #{tpu_custom_call.1} parent=1 // pred_check_branch
      %569 = sbr.rel (0) target = $region29
    $region28: #{tpu_custom_call.1} parent=1 // pred_region
      %571 = dma.done [#allocation4], 128
    $region29: #{tpu_custom_call.1} parent=1 // pred_fallthru
      _
    %572 = vsyncpa [#allocation3], 1
    %573 = vsyncpa [#allocation6], 1
    %574 = vsyncpa [#allocation4], 1

</llo_original>
